<compile_context>
chip_gen: v7x
topology: tpu7x:2x2x1
jax: 0.10.0
libtpu: 0.0.40
codegen_flags: <defaults>
</compile_context>

<pallas_src>
import functools
import math

import jax
import jax.numpy as jnp
from jax.experimental import pallas as pl
from jax.experimental.pallas import tpu as pltpu


def _drop_path_kernel(mask_ref, x_ref, o_ref, *, inv_keep: float):
    """Pure scaled copy: o = x * (mask[b] ? 1/keep_prob : 0)."""
    b = pl.program_id(0)
    keep = mask_ref[b] > 0                                   # scalar SMEM read
    scale = jnp.where(keep, inv_keep, 0.0).astype(o_ref.dtype)
    o_ref[...] = x_ref[...] * scale                          # vld / vmul / vst


def _pick_lane(num_features: int):
    """Largest lane-dense width (multiple of 128) dividing F; else pad to 512."""
    for lane in (2048, 1024, 512, 256, 128):
        if num_features % lane == 0:
            return lane, num_features
    lane = 512
    padded = ((num_features + lane - 1) // lane) * lane
    return lane, padded


def drop_path(x: jax.Array, key: jax.Array, keep_prob: float = 0.5,
              training: bool = True) -> jax.Array:
    """DropPath forward. x is (B, ...) — the mask is per leading-dim sample."""
    # Matches the PyTorch module: drop-path applies only when training and
    # keep_prob > 0; every other case is identity.
    if (not training) or keep_prob <= 0.0:
        return x

    B = x.shape[0]
    F = math.prod(x.shape[1:])

    # Per-sample Bernoulli mask, computed outside the kernel.
    mask = jax.random.bernoulli(key, p=keep_prob, shape=(B,)).astype(jnp.int32)

    # Flatten features into a lane-dense 2D/3D layout (free layout plumbing).
    lane, F_pad = _pick_lane(F)
    xf = x.reshape(B, F)
    if F_pad != F:
        xf = jnp.pad(xf, ((0, 0), (0, F_pad - F)))
    S = F_pad // lane
    x3 = xf.reshape(B, S, lane)

    itemsize = jnp.dtype(x.dtype).itemsize
    # ~1 MiB per block buffer; sublane tile is a multiple of 8 or the full axis.
    target_rows = max(8, ((1 << 20) // (lane * itemsize)) // 8 * 8)
    tile_s = S if S <= target_rows else target_rows
    grid = (B, pl.cdiv(S, tile_s))

    kernel = functools.partial(_drop_path_kernel,
                               inv_keep=float(1.0 / keep_prob))

    n_elems = B * F_pad
    cost = pl.CostEstimate(flops=n_elems, transcendentals=0,
                           bytes_accessed=2 * n_elems * itemsize)

    y3 = pl.pallas_call(
        kernel,
        out_shape=jax.ShapeDtypeStruct((B, S, lane), x.dtype),
        grid_spec=pltpu.PrefetchScalarGridSpec(
            num_scalar_prefetch=1,          # per-sample mask lives in SMEM
            grid=grid,
            in_specs=[
                pl.BlockSpec((1, tile_s, lane), lambda b, t, mask: (b, t, 0)),
            ],
            out_specs=pl.BlockSpec((1, tile_s, lane),
                                   lambda b, t, mask: (b, t, 0)),
        ),
        compiler_params=pltpu.CompilerParams(
            # No stateful PRNG in the kernel -> fully parallel grid
            # (sharded across both TensorCores on v7x).
            dimension_semantics=("parallel", "parallel"),
        ),
        cost_estimate=cost,
    )(mask, x3)

    yf = y3.reshape(B, F_pad)
    if F_pad != F:
        yf = yf[:, :F]
    return yf.reshape(x.shape)


if __name__ == "__main__":
    key = jax.random.PRNGKey(0)
    x_key, mask_key = jax.random.split(key)

    B, C, H, W = 2, 4, 16, 16
    x = jax.random.normal(x_key, (B, C, H, W), dtype=jnp.float32)

    keep_prob = 0.5
    y = jax.block_until_ready(
        drop_path(x, mask_key, keep_prob=keep_prob, training=True))

    # Exact reference: same mask, same scaling.
    mask_ref = jax.random.bernoulli(mask_key, p=keep_prob, shape=(B,))
    expected = x * (mask_ref.astype(x.dtype) / keep_prob)[:, None, None, None]
    assert bool(jnp.allclose(y, expected, rtol=1e-6, atol=1e-6)), \
        "mismatch vs reference"

    # Each sample is either all-zero or exactly x / keep_prob.
    for b in range(B):
        yb, xb = y[b], x[b]
        is_zero = bool(jnp.all(yb == 0.0))
        is_scaled = bool(jnp.allclose(yb, xb / keep_prob, rtol=1e-6, atol=1e-6))
        assert is_zero or is_scaled, f"sample {b}: invalid DropPath output"

    # Eval mode is identity (as in the PyTorch module).
    y_eval = jax.block_until_ready(
        drop_path(x, mask_key, keep_prob=keep_prob, training=False))
    assert bool(jnp.array_equal(y_eval, x))

    # TODO(synk): the module's `inplace=True` mutation has no functional JAX
    # equivalent; it could be approximated with input_output_aliases if needed.
    print("KERNEL_OK")
</pallas_src>

<mosaic_0001>
module attributes {stable_mosaic.version = 11 : i64} {
  func.func @_drop_path_kernel(%arg0: i32, %arg1: i32, %arg2: memref<2xi32, #tpu.memory_space<smem>>, %arg3: memref<1x1x1024xf32, #tpu.memory_space<vmem>>, %arg4: memref<1x1x1024xf32, #tpu.memory_space<vmem>>) attributes {dimension_semantics = [#tpu.dimension_semantics<parallel>, #tpu.dimension_semantics<parallel>], iteration_bounds = array<i64: 2, 1>, scalar_prefetch = 1 : i64, scratch_operands = 0 : i64, tpu.core_type = #tpu.core_type<tc>, window_params = [{transform_indices = @transform_0, window_bounds = array<i64: 1, 1, 1024>}, {transform_indices = @transform_1, window_bounds = array<i64: 1, 1, 1024>}]} {
    %0 = arith.index_cast %arg0 : i32 to index
    %1 = memref.load %arg2[%0] : memref<2xi32, #tpu.memory_space<smem>>
    %c0_i32 = arith.constant 0 : i32
    %2 = arith.cmpi sgt, %1, %c0_i32 : i32
    %cst = arith.constant 2.000000e+00 : f32
    %cst_0 = arith.constant 0.000000e+00 : f32
    %3 = arith.select %2, %cst, %cst_0 : f32
    %c0 = arith.constant 0 : index
    %c0_1 = arith.constant 0 : index
    %c0_2 = arith.constant 0 : index
    %4 = vector.load %arg3[%c0, %c0_1, %c0_2] : memref<1x1x1024xf32, #tpu.memory_space<vmem>>, vector<1x1x1024xf32>
    %5 = vector.broadcast %3 : f32 to vector<1x1x1024xf32>
    %6 = arith.mulf %4, %5 : vector<1x1x1024xf32>
    %c0_3 = arith.constant 0 : index
    %c0_4 = arith.constant 0 : index
    %c0_5 = arith.constant 0 : index
    %7 = vector.load %arg4[%c0_3, %c0_4, %c0_5] : memref<1x1x1024xf32, #tpu.memory_space<vmem>>, vector<1x1x1024xf32>
    tpu.vector_store %arg4[%c0_3, %c0_4, %c0_5], %6 {strides = array<i32>} : memref<1x1x1024xf32, #tpu.memory_space<vmem>>, vector<1x1x1024xf32>,
    return
  }
  func.func @transform_0(%arg0: i32, %arg1: i32, %arg2: memref<2xi32, #tpu.memory_space<smem>>) -> (i32, i32, i32) {
    %c0_i32 = arith.constant 0 : i32
    %c0_i32_0 = arith.constant 0 : i32
    return %arg0, %arg1, %c0_i32 : i32, i32, i32
  }
  func.func @transform_1(%arg0: i32, %arg1: i32, %arg2: memref<2xi32, #tpu.memory_space<smem>>) -> (i32, i32, i32) {
    %c0_i32 = arith.constant 0 : i32
    %c0_i32_0 = arith.constant 0 : i32
    return %arg0, %arg1, %c0_i32 : i32, i32, i32
  }
}

</mosaic_0001>

<llo_original>
// kernel: tpu_custom_call.1
$region0: #{tpu_custom_call.1}
  #allocation0 [shape = 'u32[]', space=smem, size = 0x4, offset = 0x4, fixed_abs, tag = 'smem constant byte address 0x4 - core index']
  #allocation1 [shape = 'u32[144,128]{1,0:T(1,128)}', space=vmem, size = 0x12000, scoped, tag = 'internal scratch']
  #allocation2 [shape = 's32[1]{0}', space=sflag, size = 0x4, scoped, tag = 'scoped memory for tpu_custom_call.1']
  #allocation3 [shape = 'u8[512]{0}', space=smem, size = 0x200, scoped, tag = 'prefetched SMEM operand 0']
  %s0 = inlined_call_operand.hbm [shape: s32[2], index: 0, kind: input, shape index: {}]
  %s1 = inlined_call_operand.hbm [shape: f32[2,1,1024], index: 1, kind: input, shape index: {}]
  %s2 = inlined_call_operand.hbm [shape: f32[2,1,1024], index: 2, kind: output, shape index: {}]
  %s3 = sld [smem:[#allocation0]]
  $region41: #{tpu_custom_call.1} parent=0
    _
  %s5 = ssub.s32 1, %s3
  %s6 = scalar_select 0, %s5, %s3
  %8 = dma.hbm_to_smem %s0, 16, [#allocation3], [#allocation2]
  %9 = dma.done [#allocation2], 16
  %10 = sfence
  $region1: #{tpu_custom_call.1} parent=0
    #allocation4 [shape = 'u8[8192]{0}', space=vmem, size = 0x2000, scoped, tag = 'input window, operand 1']
    #allocation5 [shape = 's32[2]{0}', space=sflag, size = 0x8, scoped, tag = 'scoped memory for tpu_custom_call.1']
    #allocation6 [shape = 's32[2]{0}', space=sflag, size = 0x8, scoped, tag = 'scoped memory for tpu_custom_call.1']
    #allocation7 [shape = 'u8[8192]{0}', space=vmem, size = 0x2000, scoped, tag = 'output window, operand 0']
    %11 = vsyncpa [#allocation5], 0
    %s12 = scalar_lea.sflag [#allocation5], 1
    %13 = vsyncpa %s12, 0
    %14 = vsyncpa [#allocation6], 0
    %s15 = scalar_lea.sflag [#allocation6], 1
    %16 = vsyncpa %s15, 0
    loop: start=0, step=1, limit=4
    $region2: #{tpu_custom_call.1} parent=1 // loop_pre_header
      _
    $region3: #{tpu_custom_call.1} parent=1 // loop_header
      %s18 = sphi 0, %s22
      %p19 = scmp.ge.s32.totalorder %s18, 4
      %s25 = sphi 0, %s37
      %s26 = sphi 0, %s33
      %s27 = sphi 0, %s25
      %s28 = sphi 0, %s26
      %s29 = sphi 0, %s27
      %s30 = sphi 0, %s28
      %s42 = sphi 0, %s44
      %s45 = sphi 0, %s42
      %s46 = sphi 0, %s45
      %s62 = sphi 0, %s46
      %s70 = sphi 0, %s72
      %s73 = sphi 0, %s70
      %s74 = sphi 0, %s73
      %s90 = sphi 0, %s74
    $region4: #{tpu_custom_call.1} parent=1 // loop_header_branch
      %21 = sbr.rel (%p19) target = $region8
    $region5: #{tpu_custom_call.1} parent=1 // loop_body
      %s23 = ssub.s32 %s18, 1
      %s24 = ssub.s32 %s18, 2
      %s31 = sadd.s32 1, %s26
      %p32 = scmp.ge.s32.totalorder %s31, 1
      %s33 = scalar_select %p32, 0, %s31
      %s34 = sadd.s32 1, %s25
      %s35 = scalar_select %p32, %s34, %s25
      %p36 = scmp.ge.s32.totalorder %s35, 2
      %s37 = scalar_select %p36, 0, %s35
      %s38 = ssub.s32 %s25, %s37
      %s39 = ssub.s32 %s26, %s33
      %s40 = sor.u32 %s38, %s39
      %p41 = scmp.eq.s32.totalorder %s40, 0
      %s43 = sadd.s32 %s42, 1
      %s44 = scalar_select %p41, %s42, %s43
      %p47 = pneg %p41
      %p48 = scmp.eq.s32.totalorder %s18, 1
      %p49 = por %p47, %p48
      %p50 = scmp.ne.s32.totalorder %s42, %s45
      %p51 = scmp.eq.s32.totalorder %s18, 0
      %p52 = por %p50, %p51
      %p53 = scmp.ne.s32.totalorder %s42, %s45
      %p54 = scmp.eq.s32.totalorder %s23, 1
      %p55 = por %p53, %p54
      %p56 = scmp.ne.s32.totalorder %s45, %s46
      %p57 = scmp.eq.s32.totalorder %s23, 0
      %p58 = por %p56, %p57
      %p59 = scmp.ne.s32.totalorder %s45, %s46
      %p60 = scmp.eq.s32.totalorder %s24, 1
      %p61 = por %p59, %p60
      %p63 = scmp.ne.s32.totalorder %s46, %s62
      %p64 = scmp.eq.s32.totalorder %s24, 0
      %p65 = por %p63, %p64
      %s66 = ssub.s32 %s25, %s37
      %s67 = ssub.s32 %s26, %s33
      %s68 = sor.u32 %s66, %s67
      %p69 = scmp.eq.s32.totalorder %s68, 0
      %s71 = sadd.s32 %s70, 1
      %s72 = scalar_select %p69, %s70, %s71
      %p75 = pneg %p69
      %p76 = scmp.eq.s32.totalorder %s18, 1
      %p77 = por %p75, %p76
      %p78 = scmp.ne.s32.totalorder %s70, %s73
      %p79 = scmp.eq.s32.totalorder %s18, 0
      %p80 = por %p78, %p79
      %p81 = scmp.ne.s32.totalorder %s70, %s73
      %p82 = scmp.eq.s32.totalorder %s23, 1
      %p83 = por %p81, %p82
      %p84 = scmp.ne.s32.totalorder %s73, %s74
      %p85 = scmp.eq.s32.totalorder %s23, 0
      %p86 = por %p84, %p85
      %p87 = scmp.ne.s32.totalorder %s73, %s74
      %p88 = scmp.eq.s32.totalorder %s24, 1
      %p89 = por %p87, %p88
      %p91 = scmp.ne.s32.totalorder %s74, %s90
      %p92 = scmp.eq.s32.totalorder %s24, 0
      %p93 = por %p91, %p92
      %p94 = scmp.le.s32.totalorder 1, %s18
      %p95 = scmp.lt.s32.totalorder %s18, 3
      %p96 = pnand %p94, %p95
      %p97 = pneg %p96
      // Predicated region
      $region9: #{tpu_custom_call.1} parent=5 // pred_check
        _
      $region10: #{tpu_custom_call.1} parent=5 // pred_check_branch
        %99 = sbr.rel (%p96) target = $region12
      $region11: #{tpu_custom_call.1} parent=5 // pred_region
        %s100 = ssub.s32 %s18, 1
      $region12: #{tpu_custom_call.1} parent=5 // pred_fallthru
        _
      %p101 = scmp.lt.s32.totalorder %s18, 2
      // Predicated region
      $region13: #{tpu_custom_call.1} parent=5 // pred_check
        %p102 = pneg %p101
      $region14: #{tpu_custom_call.1} parent=5 // pred_check_branch
        %104 = sbr.rel (%p102) target = $region16
      $region15: #{tpu_custom_call.1} parent=5 // pred_region
        // Predicated region
        $region17: #{tpu_custom_call.1} parent=15 // pred_check
          %p105 = pneg %p52
        $region18: #{tpu_custom_call.1} parent=15 // pred_check_branch
          %107 = sbr.rel (%p105) target = $region20
        $region19: #{tpu_custom_call.1} parent=15 // pred_region
          %s108 = sand.u32 %s42, 1
          %s109 = scalar_lea.sflag [#allocation5], %s108
          %s110 = sand.u32 %s42, 1
          %s111 = smul.addr %s110, 8
          %s112 = scalar_lea.vmem [#allocation4], %s111
          %s114 = ssub.s32 128, 128
          %115 = vsyncadd %s109, %s114
          %s116 = smul.addr %s26, 8
          %s117 = smul.addr %s25, 8
          %s118 = sadd.s32 %s116, %s117
          %s119 = smul.addr %s118, 16
          %s120 = scalar_lea.hbm %s1, %s119
          %s122 = sshll.u32 %s112, 4
          %s123 = int_to_ptr.vmem [resolvable:$true] %s122
          %125 = dma.hbm_to_vmem [thread:$0]  %s120, 128, %s123, %s109
        $region20: #{tpu_custom_call.1} parent=15 // pred_fallthru
          _
      $region16: #{tpu_custom_call.1} parent=5 // pred_fallthru
        _
      %p126 = scmp.le.s32.totalorder 1, %s18
      %p127 = scmp.lt.s32.totalorder %s18, 3
      %p128 = pnand %p126, %p127
      %p129 = pneg %p128
      // Predicated region
      $region21: #{tpu_custom_call.1} parent=5 // pred_check
        _
      $region22: #{tpu_custom_call.1} parent=5 // pred_check_branch
        %131 = sbr.rel (%p128) target = $region24
      $region23: #{tpu_custom_call.1} parent=5 // pred_region
        %s132 = ssub.s32 %s18, 1
        %s133 = sand.u32 %s45, 1
        %s134 = scalar_lea.sflag [#allocation5], %s133
        %s135 = sand.u32 %s45, 1
        %s136 = smul.addr %s135, 8
        %s137 = scalar_lea.vmem [#allocation4], %s136
        // Predicated region
        $region25: #{tpu_custom_call.1} parent=23 // pred_check
          %p138 = pneg %p58
        $region26: #{tpu_custom_call.1} parent=23 // pred_check_branch
          %140 = sbr.rel (%p138) target = $region28
        $region27: #{tpu_custom_call.1} parent=23 // pred_region
          %141 = dma.done %s134, 128
        $region28: #{tpu_custom_call.1} parent=23 // pred_fallthru
          _
        %s142 = sand.u32 %s45, 1
        %s143 = scalar_lea.sflag [#allocation5], %s142
        %s144 = sand.u32 %s45, 1
        %s145 = smul.addr %s144, 8
        %s146 = scalar_lea.vmem [#allocation4], %s145
        %p147 = pneg %p58
        %p148 = pneg %p55
        %p149 = pneg %p86
        %p150 = pneg %p83
        %s151 = sand.u32 %s73, 1
        %s152 = scalar_lea.sflag [#allocation6], %s151
        %s153 = sand.u32 %s73, 1
        %s154 = smul.addr %s153, 8
        %s155 = scalar_lea.vmem [#allocation7], %s154
        %s156 = sld [smem:[#allocation3 + %s27]]
        %p157 = scmp.gt.s32.totalorder %s156, 0
        %s158 = scalar_select %p157, 2.0, 0.0
        %v159 = vld [vmem:[%s137] sm:$0xff]
        %v160 = vstv %s158
        %v161 = vmul.f32 %v159, %v160
        %162 = vst [vmem:[%s155] sm:$0xff] %v161
        %s163 = sand.u32 %s73, 1
        %s164 = scalar_lea.sflag [#allocation6], %s163
        %s165 = sand.u32 %s73, 1
        %s166 = smul.addr %s165, 8
        %s167 = scalar_lea.vmem [#allocation7], %s166
        // Predicated region
        $region29: #{tpu_custom_call.1} parent=23 // pred_check
          %p168 = pneg %p83
        $region30: #{tpu_custom_call.1} parent=23 // pred_check_branch
          %170 = sbr.rel (%p168) target = $region32
        $region31: #{tpu_custom_call.1} parent=23 // pred_region
          %s172 = ssub.s32 128, 128
          %173 = vsyncadd %s164, %s172
          %s174 = smul.addr %s28, 8
          %s175 = smul.addr %s27, 8
          %s176 = sadd.s32 %s174, %s175
          %s177 = smul.addr %s176, 16
          %s178 = scalar_lea.hbm %s2, %s177
          %s180 = sshll.u32 %s167, 4
          %s181 = int_to_ptr.vmem [resolvable:$true] %s180
          %183 = dma.vmem_to_hbm [thread:$0]  %s181, 128, %s178, %s164
        $region32: #{tpu_custom_call.1} parent=23 // pred_fallthru
          _
      $region24: #{tpu_custom_call.1} parent=5 // pred_fallthru
        _
      %p184 = scmp.le.s32.totalorder 2, %s18
      // Predicated region
      $region33: #{tpu_custom_call.1} parent=5 // pred_check
        %p185 = pneg %p184
      $region34: #{tpu_custom_call.1} parent=5 // pred_check_branch
        %187 = sbr.rel (%p185) target = $region36
      $region35: #{tpu_custom_call.1} parent=5 // pred_region
        %s188 = ssub.s32 %s18, 2
        // Predicated region
        $region37: #{tpu_custom_call.1} parent=35 // pred_check
          %p189 = pneg %p89
        $region38: #{tpu_custom_call.1} parent=35 // pred_check_branch
          %191 = sbr.rel (%p189) target = $region40
        $region39: #{tpu_custom_call.1} parent=35 // pred_region
          %s192 = sand.u32 %s74, 1
          %s193 = scalar_lea.sflag [#allocation6], %s192
          %s194 = sand.u32 %s74, 1
          %s195 = smul.addr %s194, 8
          %s196 = scalar_lea.vmem [#allocation7], %s195
          %197 = dma.done %s193, 128
        $region40: #{tpu_custom_call.1} parent=35 // pred_fallthru
          _
      $region36: #{tpu_custom_call.1} parent=5 // pred_fallthru
        _
    $region6: #{tpu_custom_call.1} parent=1 // loop_footer
      %s22 = sadd.s32 1, %s18
    $region7: #{tpu_custom_call.1} parent=1 // loop_footer_branch
      %17 = sbr.rel target = $region3
    $region8: #{tpu_custom_call.1} parent=1 // loop_exit
      _
    %198 = vsyncpa [#allocation5], 1
    %s199 = scalar_lea.sflag [#allocation5], 1
    %200 = vsyncpa %s199, 1
    %201 = vsyncpa [#allocation6], 1
    %s202 = scalar_lea.sflag [#allocation6], 1
    %203 = vsyncpa %s202, 1

</llo_original>
